<compile_context>
chip_gen: v7x
topology: tpu7x:2x2x1
jax: 0.10.0
libtpu: 0.0.40
codegen_flags: <defaults>
</compile_context>

<pallas_src>
import functools

import jax
import jax.numpy as jnp
from jax.experimental import pallas as pl
from jax.experimental.pallas import tpu as pltpu


def _cdiv(a, b):
    return -(-a // b)


def _round_up(x, m):
    return _cdiv(x, m) * m


def _multitask_loss_kernel(x_ref, tgt_ref, alpha_ref, out_ref, *,
                           n_classes, gamma, second_mult):
    """One batch tile.

    x_ref:     (C+1, tns, 128) f32  class/reg planes x (sublane-rows x lanes)
    tgt_ref:   (tns, 128)      i32
    alpha_ref: (C,)            f32  in SMEM (read as scalars)
    out_ref:   (1, 8, 128)     f32  per-core dense partial-sum accumulator
    """
    step = pl.program_id(1)

    @pl.when(step == 0)
    def _init():
        out_ref[...] = jnp.zeros_like(out_ref)

    tgt = tgt_ref[...]                                   # (tns, 128) i32
    reg = x_ref[n_classes]                               # (tns, 128) f32

    # Row max over the small class axis: C-1 dense VPU max ops.
    m = x_ref[0]
    for c in range(1, n_classes):
        m = jnp.maximum(m, x_ref[c])

    # One unrolled pass over the class planes (assumes small C): softmax
    # denominator plus "gathers" of exp(x_t - m), x_t and alpha[t] done as
    # per-plane selects against the target plane index.
    sumexp = jnp.zeros_like(m)
    e_t = jnp.zeros_like(m)
    logit_t = jnp.zeros_like(m)
    alpha_t = jnp.zeros_like(m)
    for c in range(n_classes):
        xc = x_ref[c]
        ec = jnp.exp(xc - m)                             # EUP
        sumexp = sumexp + ec
        is_c = tgt == c
        e_t = jnp.where(is_c, ec, e_t)
        logit_t = jnp.where(is_c, xc, logit_t)
        alpha_t = jnp.where(is_c, alpha_ref[c], alpha_t)  # SMEM scalar splat

    ce = jnp.log(sumexp) + m - logit_t                   # logsumexp - x[target]
    inv_sum = pl.reciprocal(sumexp, approx=True)         # EUP vrcp (~1e-3 rel)
    omp = (sumexp - e_t) * inv_sum                        # 1 - pt

    g = float(gamma)
    if g == 2.0:                                          # default: mult chain
        w = omp * omp
    elif g == int(g) and g >= 0.0:                        # any integer gamma
        w = jnp.ones_like(omp)
        for _ in range(int(g)):
            w = w * omp
    else:                                                 # non-integer gamma
        w = omp ** g
    focal = alpha_t * w * ce                              # (tns, 128)

    # Regression head against targets.float().  Padded samples were built so
    # that both focal and diff are exactly zero -> no masking needed.
    diff = reg - tgt.astype(jnp.float32)
    contrib = focal + jnp.float32(second_mult) * (diff * diff)

    # Dense accumulation into the resident (1, 8, 128) output block; the
    # cross-lane/sublane reduction is deferred to the wrapper epilogue.
    tns = contrib.shape[0]
    out_ref[...] += jnp.sum(contrib.reshape(1, tns // 8, 8, 128), axis=1)


def multitask_loss(inputs, targets, alpha, *, gamma=2.0, second_mult=0.1,
                   block_rows=None):
    """inputs (N, C+1) f32, targets (N,) int, alpha (C,) f32 -> scalar f32."""
    n, cp1 = inputs.shape
    n_classes = cp1 - 1

    # ---- plan: batch axis as (sublane-rows x 128 lanes) --------------------
    rows = _cdiv(n, 128)                         # 128-sample rows of real data
    if block_rows is None:
        block_rows = 1024                        # ~2.5 MiB x-block for C = 4
    block_rows = max(8, _round_up(int(block_rows), 8))
    ncores = 2 if rows >= 16 else 1              # use the 2nd TC on v7x only
    rows_per_core = _cdiv(rows, ncores)
    tns = min(block_rows, _round_up(rows_per_core, 8))
    steps = _cdiv(rows_per_core, tns)
    nb = ncores * steps * tns                    # padded row count (mult of 8)
    n_pad = nb * 128                             # padded sample count
    pad = n_pad - n

    # ---- sentinel padding: padded samples contribute exactly zero ----------
    # target = n_classes (outside [0, C)) -> alpha_t = 0 -> focal = 0;
    # reg column = float(n_classes) matches the float target -> sq err = 0.
    x = inputs.astype(jnp.float32)
    tgt = targets.astype(jnp.int32)
    alpha1 = alpha.astype(jnp.float32).reshape(n_classes)
    if pad:
        pad_x = jnp.concatenate(
            [jnp.zeros((pad, n_classes), jnp.float32),
             jnp.full((pad, 1), float(n_classes), jnp.float32)], axis=1)
        x = jnp.concatenate([x, pad_x], axis=0)
        tgt = jnp.concatenate(
            [tgt, jnp.full((pad,), n_classes, jnp.int32)], axis=0)

    # Single relayout so the batch axis is dense on (sublane x lane) and the
    # tiny class axis is a small leading axis.  This is the one extra HBM pass
    # left; a producer emitting (C+1, N) directly would remove it.
    x_t = x.T.reshape(cp1, nb, 128)              # (C+1, NB, 128)
    tgt2 = tgt.reshape(nb, 128)                  # (NB, 128)  (free reshape)

    kernel = functools.partial(
        _multitask_loss_kernel, n_classes=n_classes, gamma=float(gamma),
        second_mult=float(second_mult))

    partials = pl.pallas_call(
        kernel,
        out_shape=jax.ShapeDtypeStruct((ncores, 8, 128), jnp.float32),
        grid_spec=pltpu.PrefetchScalarGridSpec(
            num_scalar_prefetch=0,
            grid=(ncores, steps),
            in_specs=[
                pl.BlockSpec((cp1, tns, 128),
                             lambda co, i, s=steps: (0, co * s + i, 0)),
                pl.BlockSpec((tns, 128),
                             lambda co, i, s=steps: (co * s + i, 0)),
                pl.BlockSpec(memory_space=pltpu.MemorySpace.SMEM),  # alpha
            ],
            out_specs=pl.BlockSpec((1, 8, 128), lambda co, i: (co, 0, 0)),
        ),
        compiler_params=pltpu.CompilerParams(
            # Leading axis split across TensorCores (v7x); inner batch axis
            # carries the running accumulator -> "arbitrary".
            dimension_semantics=("parallel", "arbitrary"),
            vmem_limit_bytes=48 * 1024 * 1024,
        ),
    )(x_t, tgt2, alpha1)

    # Tiny epilogue: reduce the 2*8*128 per-core partials and divide by true N.
    return jnp.sum(partials) * jnp.float32(1.0 / n)


def _reference_loss(inputs, targets, alpha, gamma=2.0, second_mult=0.1):
    """Pure-JAX reference mirroring the PyTorch module."""
    logits = inputs[:, :-1]
    reg = inputs[:, -1]
    logz = jax.nn.logsumexp(logits, axis=-1)
    ce = logz - jnp.take_along_axis(logits, targets[:, None], axis=-1)[:, 0]
    pt = jnp.exp(-ce)
    focal = alpha[targets] * (1.0 - pt) ** gamma * ce
    mse = jnp.mean((reg - targets.astype(jnp.float32)) ** 2)
    return jnp.mean(focal) + second_mult * mse


if __name__ == "__main__":
    key = jax.random.PRNGKey(0)

    # Small shapes consistent with the module: batch=8, 4 classes + 1 reg head.
    N, C = 8, 4
    k1, k2, k3, k4 = jax.random.split(key, 4)
    inputs = jax.random.normal(k1, (N, C + 1), dtype=jnp.float32)
    targets = jax.random.randint(k2, (N,), 0, C, dtype=jnp.int32)
    alpha = jnp.linspace(0.25, 1.0, C, dtype=jnp.float32)

    loss = jax.jit(multitask_loss)(inputs, targets, alpha)
    jax.block_until_ready(loss)
    ref = _reference_loss(inputs, targets, alpha)
    assert jnp.allclose(loss, ref, rtol=1e-2, atol=1e-5), (loss, ref)

    # Exercise the parallel-axis + multi-step accumulation + sentinel-padding
    # path: 6003 samples with 8-row (1024-sample) blocks -> grid (2, 3),
    # 141 padded samples that must contribute exactly zero.
    N2 = 6003
    inputs2 = jax.random.normal(k3, (N2, C + 1), dtype=jnp.float32)
    targets2 = jax.random.randint(k4, (N2,), 0, C, dtype=jnp.int32)
    loss2 = jax.jit(functools.partial(multitask_loss, block_rows=8))(
        inputs2, targets2, alpha)
    jax.block_until_ready(loss2)
    ref2 = _reference_loss(inputs2, targets2, alpha)
    assert jnp.allclose(loss2, ref2, rtol=1e-2, atol=1e-5), (loss2, ref2)

    print("KERNEL_OK")
</pallas_src>

<mosaic_0001>
module attributes {stable_mosaic.version = 11 : i64} {
  func.func @_multitask_loss_kernel(%arg0: i32, %arg1: i32, %arg2: memref<5x8x128xf32, #tpu.memory_space<vmem>>, %arg3: memref<8x128xi32, #tpu.memory_space<vmem>>, %arg4: memref<4xf32, #tpu.memory_space<smem>>, %arg5: memref<1x8x128xf32, #tpu.memory_space<vmem>>) attributes {dimension_semantics = [#tpu.dimension_semantics<parallel>, #tpu.dimension_semantics<arbitrary>], iteration_bounds = array<i64: 1, 1>, scalar_prefetch = 0 : i64, scratch_operands = 0 : i64, tpu.core_type = #tpu.core_type<tc>, window_params = [{transform_indices = @transform_0, window_bounds = array<i64: 5, 8, 128>}, {transform_indices = @transform_1, window_bounds = array<i64: 8, 128>}, {transform_indices = @transform_2, window_bounds = array<i64: 4>}, {transform_indices = @transform_3, window_bounds = array<i64: 1, 8, 128>}]} {
    %c0_i32 = arith.constant 0 : i32
    %0 = arith.cmpi eq, %arg1, %c0_i32 : i32
    %1 = arith.extui %0 : i1 to i32
    %c0_i32_0 = arith.constant 0 : i32
    %2 = arith.cmpi ne, %1, %c0_i32_0 : i32
    scf.if %2 {
      %cst_41 = arith.constant 0.000000e+00 : f32
      %89 = vector.broadcast %cst_41 : f32 to vector<1x8x128xf32>
      %c0_42 = arith.constant 0 : index
      %c0_43 = arith.constant 0 : index
      %c0_44 = arith.constant 0 : index
      %90 = vector.load %arg5[%c0_42, %c0_43, %c0_44] : memref<1x8x128xf32, #tpu.memory_space<vmem>>, vector<1x8x128xf32>
      tpu.vector_store %arg5[%c0_42, %c0_43, %c0_44], %89 {strides = array<i32>} : memref<1x8x128xf32, #tpu.memory_space<vmem>>, vector<1x8x128xf32>,
    } else {
    }
    %c0 = arith.constant 0 : index
    %c0_1 = arith.constant 0 : index
    %3 = vector.load %arg3[%c0, %c0_1] : memref<8x128xi32, #tpu.memory_space<vmem>>, vector<8x128xi32>
    %c4 = arith.constant 4 : index
    %c0_2 = arith.constant 0 : index
    %c0_3 = arith.constant 0 : index
    %4 = vector.load %arg2[%c4, %c0_2, %c0_3] : memref<5x8x128xf32, #tpu.memory_space<vmem>>, vector<1x8x128xf32>
    %5 = vector.shape_cast %4 : vector<1x8x128xf32> to vector<8x128xf32>
    %c0_4 = arith.constant 0 : index
    %c0_5 = arith.constant 0 : index
    %c0_6 = arith.constant 0 : index
    %6 = vector.load %arg2[%c0_4, %c0_5, %c0_6] : memref<5x8x128xf32, #tpu.memory_space<vmem>>, vector<1x8x128xf32>
    %7 = vector.shape_cast %6 : vector<1x8x128xf32> to vector<8x128xf32>
    %c1 = arith.constant 1 : index
    %c0_7 = arith.constant 0 : index
    %c0_8 = arith.constant 0 : index
    %8 = vector.load %arg2[%c1, %c0_7, %c0_8] : memref<5x8x128xf32, #tpu.memory_space<vmem>>, vector<1x8x128xf32>
    %9 = vector.shape_cast %8 : vector<1x8x128xf32> to vector<8x128xf32>
    %10 = arith.maximumf %7, %9 : vector<8x128xf32>
    %c2 = arith.constant 2 : index
    %c0_9 = arith.constant 0 : index
    %c0_10 = arith.constant 0 : index
    %11 = vector.load %arg2[%c2, %c0_9, %c0_10] : memref<5x8x128xf32, #tpu.memory_space<vmem>>, vector<1x8x128xf32>
    %12 = vector.shape_cast %11 : vector<1x8x128xf32> to vector<8x128xf32>
    %13 = arith.maximumf %10, %12 : vector<8x128xf32>
    %c3 = arith.constant 3 : index
    %c0_11 = arith.constant 0 : index
    %c0_12 = arith.constant 0 : index
    %14 = vector.load %arg2[%c3, %c0_11, %c0_12] : memref<5x8x128xf32, #tpu.memory_space<vmem>>, vector<1x8x128xf32>
    %15 = vector.shape_cast %14 : vector<1x8x128xf32> to vector<8x128xf32>
    %16 = arith.maximumf %13, %15 : vector<8x128xf32>
    %cst = arith.constant 0.000000e+00 : f32
    %17 = vector.broadcast %cst : f32 to vector<8x128xf32>
    %cst_13 = arith.constant 0.000000e+00 : f32
    %18 = vector.broadcast %cst_13 : f32 to vector<8x128xf32>
    %cst_14 = arith.constant 0.000000e+00 : f32
    %19 = vector.broadcast %cst_14 : f32 to vector<8x128xf32>
    %cst_15 = arith.constant 0.000000e+00 : f32
    %20 = vector.broadcast %cst_15 : f32 to vector<8x128xf32>
    %c0_16 = arith.constant 0 : index
    %c0_17 = arith.constant 0 : index
    %c0_18 = arith.constant 0 : index
    %21 = vector.load %arg2[%c0_16, %c0_17, %c0_18] : memref<5x8x128xf32, #tpu.memory_space<vmem>>, vector<1x8x128xf32>
    %22 = vector.shape_cast %21 : vector<1x8x128xf32> to vector<8x128xf32>
    %23 = arith.subf %22, %16 : vector<8x128xf32>
    %24 = math.exp %23 : vector<8x128xf32>
    %25 = arith.addf %17, %24 : vector<8x128xf32>
    %c0_i32_19 = arith.constant 0 : i32
    %26 = vector.broadcast %c0_i32_19 : i32 to vector<8x128xi32>
    %27 = arith.cmpi eq, %3, %26 : vector<8x128xi32>
    %28 = arith.select %27, %24, %18 : vector<8x128xi1>, vector<8x128xf32>
    %29 = arith.select %27, %22, %19 : vector<8x128xi1>, vector<8x128xf32>
    %c0_20 = arith.constant 0 : index
    %30 = memref.load %arg4[%c0_20] : memref<4xf32, #tpu.memory_space<smem>>
    %31 = vector.broadcast %30 : f32 to vector<8x128xf32>
    %32 = arith.select %27, %31, %20 : vector<8x128xi1>, vector<8x128xf32>
    %c1_21 = arith.constant 1 : index
    %c0_22 = arith.constant 0 : index
    %c0_23 = arith.constant 0 : index
    %33 = vector.load %arg2[%c1_21, %c0_22, %c0_23] : memref<5x8x128xf32, #tpu.memory_space<vmem>>, vector<1x8x128xf32>
    %34 = vector.shape_cast %33 : vector<1x8x128xf32> to vector<8x128xf32>
    %35 = arith.subf %34, %16 : vector<8x128xf32>
    %36 = math.exp %35 : vector<8x128xf32>
    %37 = arith.addf %25, %36 : vector<8x128xf32>
    %c1_i32 = arith.constant 1 : i32
    %38 = vector.broadcast %c1_i32 : i32 to vector<8x128xi32>
    %39 = arith.cmpi eq, %3, %38 : vector<8x128xi32>
    %40 = arith.select %39, %36, %28 : vector<8x128xi1>, vector<8x128xf32>
    %41 = arith.select %39, %34, %29 : vector<8x128xi1>, vector<8x128xf32>
    %c1_24 = arith.constant 1 : index
    %42 = memref.load %arg4[%c1_24] : memref<4xf32, #tpu.memory_space<smem>>
    %43 = vector.broadcast %42 : f32 to vector<8x128xf32>
    %44 = arith.select %39, %43, %32 : vector<8x128xi1>, vector<8x128xf32>
    %c2_25 = arith.constant 2 : index
    %c0_26 = arith.constant 0 : index
    %c0_27 = arith.constant 0 : index
    %45 = vector.load %arg2[%c2_25, %c0_26, %c0_27] : memref<5x8x128xf32, #tpu.memory_space<vmem>>, vector<1x8x128xf32>
    %46 = vector.shape_cast %45 : vector<1x8x128xf32> to vector<8x128xf32>
    %47 = arith.subf %46, %16 : vector<8x128xf32>
    %48 = math.exp %47 : vector<8x128xf32>
    %49 = arith.addf %37, %48 : vector<8x128xf32>
    %c2_i32 = arith.constant 2 : i32
    %50 = vector.broadcast %c2_i32 : i32 to vector<8x128xi32>
    %51 = arith.cmpi eq, %3, %50 : vector<8x128xi32>
    %52 = arith.select %51, %48, %40 : vector<8x128xi1>, vector<8x128xf32>
    %53 = arith.select %51, %46, %41 : vector<8x128xi1>, vector<8x128xf32>
    %c2_28 = arith.constant 2 : index
    %54 = memref.load %arg4[%c2_28] : memref<4xf32, #tpu.memory_space<smem>>
    %55 = vector.broadcast %54 : f32 to vector<8x128xf32>
    %56 = arith.select %51, %55, %44 : vector<8x128xi1>, vector<8x128xf32>
    %c3_29 = arith.constant 3 : index
    %c0_30 = arith.constant 0 : index
    %c0_31 = arith.constant 0 : index
    %57 = vector.load %arg2[%c3_29, %c0_30, %c0_31] : memref<5x8x128xf32, #tpu.memory_space<vmem>>, vector<1x8x128xf32>
    %58 = vector.shape_cast %57 : vector<1x8x128xf32> to vector<8x128xf32>
    %59 = arith.subf %58, %16 : vector<8x128xf32>
    %60 = math.exp %59 : vector<8x128xf32>
    %61 = arith.addf %49, %60 : vector<8x128xf32>
    %c3_i32 = arith.constant 3 : i32
    %62 = vector.broadcast %c3_i32 : i32 to vector<8x128xi32>
    %63 = arith.cmpi eq, %3, %62 : vector<8x128xi32>
    %64 = arith.select %63, %60, %52 : vector<8x128xi1>, vector<8x128xf32>
    %65 = arith.select %63, %58, %53 : vector<8x128xi1>, vector<8x128xf32>
    %c3_32 = arith.constant 3 : index
    %66 = memref.load %arg4[%c3_32] : memref<4xf32, #tpu.memory_space<smem>>
    %67 = vector.broadcast %66 : f32 to vector<8x128xf32>
    %68 = arith.select %63, %67, %56 : vector<8x128xi1>, vector<8x128xf32>
    %69 = math.log %61 : vector<8x128xf32>
    %70 = arith.addf %69, %16 : vector<8x128xf32>
    %71 = arith.subf %70, %65 : vector<8x128xf32>
    %72 = tpu.reciprocal %61 {approx = true} : vector<8x128xf32> -> vector<8x128xf32>
    %73 = arith.subf %61, %64 : vector<8x128xf32>
    %74 = arith.mulf %73, %72 : vector<8x128xf32>
    %75 = arith.mulf %74, %74 : vector<8x128xf32>
    %76 = arith.mulf %68, %75 : vector<8x128xf32>
    %77 = arith.mulf %76, %71 : vector<8x128xf32>
    %78 = arith.sitofp %3 : vector<8x128xi32> to vector<8x128xf32>
    %79 = arith.subf %5, %78 : vector<8x128xf32>
    %80 = arith.mulf %79, %79 : vector<8x128xf32>
    %cst_33 = arith.constant 1.000000e-01 : f32
    %81 = vector.broadcast %cst_33 : f32 to vector<8x128xf32>
    %82 = arith.mulf %81, %80 : vector<8x128xf32>
    %83 = arith.addf %77, %82 : vector<8x128xf32>
    %c0_34 = arith.constant 0 : index
    %c0_35 = arith.constant 0 : index
    %c0_36 = arith.constant 0 : index
    %84 = vector.load %arg5[%c0_34, %c0_35, %c0_36] : memref<1x8x128xf32, #tpu.memory_space<vmem>>, vector<1x8x128xf32>
    %85 = vector.shape_cast %83 : vector<8x128xf32> to vector<1x1x8x128xf32>
    %cst_37 = arith.constant dense<0.000000e+00> : vector<1x8x128xf32>
    %86 = vector.multi_reduction <add>, %85, %cst_37 [1] : vector<1x1x8x128xf32> to vector<1x8x128xf32>
    %87 = arith.addf %84, %86 : vector<1x8x128xf32>
    %c0_38 = arith.constant 0 : index
    %c0_39 = arith.constant 0 : index
    %c0_40 = arith.constant 0 : index
    %88 = vector.load %arg5[%c0_38, %c0_39, %c0_40] : memref<1x8x128xf32, #tpu.memory_space<vmem>>, vector<1x8x128xf32>
    tpu.vector_store %arg5[%c0_38, %c0_39, %c0_40], %87 {strides = array<i32>} : memref<1x8x128xf32, #tpu.memory_space<vmem>>, vector<1x8x128xf32>,
    return
  }
  func.func @transform_0(%arg0: i32, %arg1: i32) -> (i32, i32, i32) {
    %c1_i32 = arith.constant 1 : i32
    %0 = arith.muli %arg0, %c1_i32 : i32
    %1 = arith.addi %0, %arg1 : i32
    %c0_i32 = arith.constant 0 : i32
    %c0_i32_0 = arith.constant 0 : i32
    %c0_i32_1 = arith.constant 0 : i32
    return %c0_i32, %1, %c0_i32_0 : i32, i32, i32
  }
  func.func @transform_1(%arg0: i32, %arg1: i32) -> (i32, i32) {
    %c1_i32 = arith.constant 1 : i32
    %0 = arith.muli %arg0, %c1_i32 : i32
    %1 = arith.addi %0, %arg1 : i32
    %c0_i32 = arith.constant 0 : i32
    %c0_i32_0 = arith.constant 0 : i32
    return %1, %c0_i32 : i32, i32
  }
  func.func @transform_2(%arg0: i32, %arg1: i32) -> i32 {
    %c0_i32 = arith.constant 0 : i32
    %c0_i32_0 = arith.constant 0 : i32
    return %c0_i32 : i32
  }
  func.func @transform_3(%arg0: i32, %arg1: i32) -> (i32, i32, i32) {
    %c0_i32 = arith.constant 0 : i32
    %c0_i32_0 = arith.constant 0 : i32
    %c0_i32_1 = arith.constant 0 : i32
    return %arg0, %c0_i32, %c0_i32_0 : i32, i32, i32
  }
}

</mosaic_0001>

<llo_original>
// kernel: multitask_loss.1
$region0: #{multitask_loss.1}
  #allocation0 [shape = 'u32[]', space=smem, size = 0x4, offset = 0x4, fixed_abs, tag = 'smem constant byte address 0x4 - core index']
  #allocation1 [shape = 'u32[144,128]{1,0:T(1,128)}', space=vmem, size = 0x12000, scoped, tag = 'internal scratch']
  %s0 = inlined_call_operand.vmem [shape: f32[5,8,128], index: 0, kind: input, shape index: {}]
  %s1 = inlined_call_operand.vmem [shape: s32[8,128], index: 1, kind: input, shape index: {}]
  %s2 = inlined_call_operand.vmem [shape: f32[4], index: 2, kind: input, shape index: {}]
  %s3 = inlined_call_operand.vmem [shape: f32[1,8,128], index: 3, kind: output, shape index: {}]
  %s4 = sld [smem:[#allocation0]]
  $region30: #{multitask_loss.1} parent=0
    _
  %s6 = ssub.s32 1, %s4
  %s7 = scalar_select 0, %s6, %s4
  $region1: #{multitask_loss.1} parent=0
    #allocation2 [shape = 'u8[512]{0}', space=smem, size = 0x200, scoped, tag = 'input window, operand 2, single buffered']
    #allocation3 [shape = 's32[1]{0}', space=sflag, size = 0x4, scoped, tag = 'scoped memory for multitask_loss.1']
    %8 = vsyncpa [#allocation3], 0
    // Predicated region
    $region2: #{multitask_loss.1} parent=1 // pred_check
      _
    $region3: #{multitask_loss.1} parent=1 // pred_check_branch
      %10 = sbr.rel (0) target = $region5
    $region4: #{multitask_loss.1} parent=1 // pred_region
      %s11 = sadd.s32 0, 0
      %p12 = scmp.lt.s32.totalorder %s11, 0
      %s13 = scalar_select %p12, %s11, 0
      %s14 = smul.addr %s13, 8
      %s15 = scalar_lea.vmem %s0, %s14
      %s16 = sadd.s32 0, 0
    $region5: #{multitask_loss.1} parent=1 // pred_fallthru
      _
    // Predicated region
    $region6: #{multitask_loss.1} parent=1 // pred_check
      _
    $region7: #{multitask_loss.1} parent=1 // pred_check_branch
      %18 = sbr.rel (0) target = $region9
    $region8: #{multitask_loss.1} parent=1 // pred_region
      %s19 = sadd.s32 0, 0
      %p20 = scmp.lt.s32.totalorder %s19, 0
      %s21 = scalar_select %p20, %s19, 0
      %s22 = smul.addr %s21, 8
      %s23 = scalar_lea.vmem %s1, %s22
      %s24 = sadd.s32 0, 0
    $region9: #{multitask_loss.1} parent=1 // pred_fallthru
      _
    // Predicated region
    $region10: #{multitask_loss.1} parent=1 // pred_check
      _
    $region11: #{multitask_loss.1} parent=1 // pred_check_branch
      %26 = sbr.rel (0) target = $region13
    $region12: #{multitask_loss.1} parent=1 // pred_region
      %s28 = ssub.s32 16, 16
      %29 = vsyncadd [#allocation3], %s28
      %s31 = sshll.u32 %s2, 4
      %s32 = int_to_ptr.vmem [resolvable:$true] %s31
      %34 = dma.vmem_to_smem %s32, 16, [#allocation2], [#allocation3]
    $region13: #{multitask_loss.1} parent=1 // pred_fallthru
      _
    // Predicated region
    $region14: #{multitask_loss.1} parent=1 // pred_check
      _
    $region15: #{multitask_loss.1} parent=1 // pred_check_branch
      %36 = sbr.rel (0) target = $region17
    $region16: #{multitask_loss.1} parent=1 // pred_region
      %37 = dma.done [#allocation3], 16
    $region17: #{multitask_loss.1} parent=1 // pred_fallthru
      _
    %38 = sfence
    %s39 = sadd.s32 0, 0
    %p40 = scmp.lt.s32.totalorder %s39, 0
    %s41 = scalar_select %p40, %s39, 0
    %s42 = smul.addr %s41, 8
    %s43 = scalar_lea.vmem %s0, %s42
    %s44 = sadd.s32 0, 0
    %p45 = scmp.lt.s32.totalorder %s44, 0
    %s46 = scalar_select %p45, %s44, 0
    %s47 = smul.addr %s46, 8
    %s48 = scalar_lea.vmem %s1, %s47
    %s49 = sadd.s32 0, 0
    %p50 = scmp.lt.s32.totalorder %s49, 0
    %s51 = scalar_select %p50, %s49, 0
    %s52 = smul.addr %s51, 8
    %s53 = scalar_lea.vmem %s0, %s52
    %s54 = sadd.s32 0, 0
    %s55 = sadd.s32 0, 0
    %p56 = scmp.lt.s32.totalorder %s55, 0
    %s57 = scalar_select %p56, %s55, 0
    %s58 = smul.addr %s57, 8
    %s59 = scalar_lea.vmem %s1, %s58
    %s60 = sadd.s32 0, 0
    %p61 = scmp.eq.s32.totalorder 0, 0
    // Predicated region
    $region18: #{multitask_loss.1} parent=1 // pred_check
      %p62 = pneg %p61
    $region19: #{multitask_loss.1} parent=1 // pred_check_branch
      %64 = sbr.rel (%p62) target = $region21
    $region20: #{multitask_loss.1} parent=1 // pred_region
      %65 = vst [vmem:[%s3] sm:$0xff] 0.0
    $region21: #{multitask_loss.1} parent=1 // pred_fallthru
      _
    %v66 = vld [vmem:[%s59] sm:$0xff]
    %s67 = scalar_lea.vmem %s53, 32
    %v68 = vld [vmem:[%s67] sm:$0xff]
    %v69 = vld [vmem:[%s53] sm:$0xff]
    %s70 = scalar_lea.vmem %s53, 8
    %v71 = vld [vmem:[%s70] sm:$0xff]
    %v72 = vmax.f32 %v69, %v71
    %s73 = scalar_lea.vmem %s53, 16
    %v74 = vld [vmem:[%s73] sm:$0xff]
    %v75 = vmax.f32 %v72, %v74
    %s76 = scalar_lea.vmem %s53, 24
    %v77 = vld [vmem:[%s76] sm:$0xff]
    %v78 = vmax.f32 %v75, %v77
    %v79 = vsub.f32 %v69, %v78
    %v80 = vmul.f32 %v79, 1.442695
    %v81 = vpow.pop %v80
    %v82 = vadd.f32 %v81, 0.0
    %vm83 = vcmp.eq.s32.totalorder %v66, 0
    %v84 = vsel %vm83, %v81, 0.0
    %v85 = vsel %vm83, %v69, 0.0
    %s86 = sld [smem:[#allocation2]]
    %v87 = vstv %s86
    %v88 = vsel %vm83, %v87, 0.0
    %v89 = vsub.f32 %v71, %v78
    %v90 = vmul.f32 %v89, 1.442695
    %v91 = vpow.pop %v90
    %v92 = vadd.f32 %v82, %v91
    %vm93 = vcmp.eq.s32.totalorder %v66, 1
    %v94 = vsel %vm93, %v91, %v84
    %v95 = vsel %vm93, %v71, %v85
    %s96 = sld [smem:[#allocation2 + $0x1]]
    %v97 = vstv %s96
    %v98 = vsel %vm93, %v97, %v88
    %v99 = vsub.f32 %v74, %v78
    %v100 = vmul.f32 %v99, 1.442695
    %v101 = vpow.pop %v100
    %v102 = vadd.f32 %v92, %v101
    %vm103 = vcmp.eq.s32.totalorder %v66, 2
    %v104 = vsel %vm103, %v101, %v94
    %v105 = vsel %vm103, %v74, %v95
    %s106 = sld [smem:[#allocation2 + $0x2]]
    %v107 = vstv %s106
    %v108 = vsel %vm103, %v107, %v98
    %v109 = vsub.f32 %v77, %v78
    %v110 = vmul.f32 %v109, 1.442695
    %v111 = vpow.pop %v110
    %v112 = vadd.f32 %v102, %v111
    %vm113 = vcmp.eq.s32.totalorder %v66, 3
    %v114 = vsel %vm113, %v111, %v104
    %v115 = vsel %vm113, %v77, %v105
    %s116 = sld [smem:[#allocation2 + $0x3]]
    %v117 = vstv %s116
    %v118 = vsel %vm113, %v117, %v108
    %v119 = vlog2.pop %v112
    %v120 = vmul.f32 %v119, 0.6931472
    %v121 = vadd.f32 %v120, %v78
    %v122 = vsub.f32 %v121, %v115
    %v123 = vrcp.pop %v112
    %v124 = vsub.f32 %v112, %v114
    %v125 = vmul.f32 %v124, %v123
    %v126 = vmul.f32 %v125, %v125
    %v127 = vmul.f32 %v118, %v126
    %v128 = vmul.f32 %v127, %v122
    %v129 = vcvt.s32.f32 %v66
    %v130 = vsub.f32 %v68, %v129
    %v131 = vmul.f32 %v130, %v130
    %v132 = vmul.f32 %v131, 0.1
    %v133 = vadd.f32 %v128, %v132
    %v134 = vld [vmem:[%s3] sm:$0xff]
    %v135 = vadd.f32 %v133, 0.0
    %v136 = vadd.f32 %v134, %v135
    %137 = vst [vmem:[%s3] sm:$0xff] %v136
    // Predicated region
    $region22: #{multitask_loss.1} parent=1 // pred_check
      _
    $region23: #{multitask_loss.1} parent=1 // pred_check_branch
      %139 = sbr.rel (0) target = $region25
    $region24: #{multitask_loss.1} parent=1 // pred_region
      _
    $region25: #{multitask_loss.1} parent=1 // pred_fallthru
      _
    // Predicated region
    $region26: #{multitask_loss.1} parent=1 // pred_check
      _
    $region27: #{multitask_loss.1} parent=1 // pred_check_branch
      %141 = sbr.rel (0) target = $region29
    $region28: #{multitask_loss.1} parent=1 // pred_region
      _
    $region29: #{multitask_loss.1} parent=1 // pred_fallthru
      _
    %142 = vsyncpa [#allocation3], 1

</llo_original>
